<compile_context>
chip_gen: v7x
topology: tpu7x:2x2x1
jax: 0.10.0
libtpu: 0.0.40
codegen_flags: <defaults>
</compile_context>

<pallas_src>
import functools

import jax
import jax.numpy as jnp
from jax.experimental import pallas as pl
from jax.experimental.pallas import tpu as pltpu

LANE = 128


def _round_up(n, m):
    return ((n + m - 1) // m) * m


# ---------------------------------------------------------------------------
# Fused kernel: (multi-hot embed-fold + Linear) -> ReLU -> Linear -> ReLU -> Linear
# ---------------------------------------------------------------------------
def _qnet_fused_kernel(idx_ref, x_ref, w1c_ref, emb_ref, b1_ref,
                       w2_ref, b2_ref, w3_ref, b3_ref, o_ref, *, offsets):
    x = x_ref[...]                       # (TB, n_cont) f32
    idx = idx_ref[...]                   # (TB, n_cat)  i32
    tb = x.shape[0]
    vp = emb_ref.shape[0]                # padded sum(cat_dims)

    # ---- layer 1: continuous half (MXU) ------------------------------------
    h1 = jnp.dot(x, w1c_ref[...], preferred_element_type=jnp.float32)

    # ---- layer 1: embedding half, folded into W1 ----------------------------
    # Build a multi-hot (TB, Vp) selector from the offset-shifted categorical
    # indices (offsets are static Python ints) and do one MXU matmul against
    # the pre-folded (Vp, Hp) table == sum_i Emb_i[idx_i] @ W1_emb_i.
    iota = jax.lax.broadcasted_iota(jnp.int32, (tb, vp), 1)
    onehot = jnp.zeros((tb, vp), jnp.float32)
    for j, off in enumerate(offsets):
        col = idx[:, j:j + 1] + off                      # (TB, 1)
        onehot = onehot + (col == iota).astype(jnp.float32)
    h1 = h1 + jnp.dot(onehot, emb_ref[...], preferred_element_type=jnp.float32)
    h1 = jnp.maximum(h1 + b1_ref[...], 0.0)

    # ---- layers 2, 3 --------------------------------------------------------
    h2 = jnp.maximum(
        jnp.dot(h1, w2_ref[...], preferred_element_type=jnp.float32) + b2_ref[...],
        0.0)
    out = jnp.dot(h2, w3_ref[...], preferred_element_type=jnp.float32) + b3_ref[...]
    o_ref[...] = out.astype(o_ref.dtype)


def _fused_forward(idx, x, w1c, emb_folded, b1, w2, b2, w3, b3,
                   offsets, output_size):
    B, n_cont = x.shape
    n_cat = idx.shape[1]
    Hp = w1c.shape[1]
    Op = w3.shape[1]
    Vp = emb_folded.shape[0]

    # Batch tiling: single block for small B, 512-row tiles for large B.
    if B <= 512:
        TB = _round_up(max(B, 1), 8)
    else:
        TB = 512
    Bp = _round_up(B, TB)
    if Bp != B:
        x = jnp.pad(x, ((0, Bp - B), (0, 0)))
        idx = jnp.pad(idx, ((0, Bp - B), (0, 0)))   # index 0 is valid; rows sliced off
    nb = Bp // TB

    kernel = functools.partial(_qnet_fused_kernel, offsets=offsets)

    flops = 2 * Bp * (n_cont * Hp + Vp * Hp + Hp * Hp + Hp * Op)
    bytes_accessed = 4 * (idx.size + x.size + w1c.size + emb_folded.size
                          + b1.size + w2.size + b2.size + w3.size + b3.size
                          + Bp * Op)

    out = pl.pallas_call(
        kernel,
        out_shape=jax.ShapeDtypeStruct((Bp, Op), jnp.float32),
        grid=(nb,),
        in_specs=[
            pl.BlockSpec((TB, n_cat), lambda i: (i, 0)),     # cat indices
            pl.BlockSpec((TB, n_cont), lambda i: (i, 0)),    # continuous feats
            pl.BlockSpec(w1c.shape, lambda i: (0, 0)),       # resident weights
            pl.BlockSpec(emb_folded.shape, lambda i: (0, 0)),
            pl.BlockSpec(b1.shape, lambda i: (0, 0)),
            pl.BlockSpec(w2.shape, lambda i: (0, 0)),
            pl.BlockSpec(b2.shape, lambda i: (0, 0)),
            pl.BlockSpec(w3.shape, lambda i: (0, 0)),
            pl.BlockSpec(b3.shape, lambda i: (0, 0)),
        ],
        out_specs=pl.BlockSpec((TB, Op), lambda i: (i, 0)),
        compiler_params=pltpu.CompilerParams(
            dimension_semantics=("parallel",)),
        cost_estimate=pl.CostEstimate(
            flops=flops, transcendentals=0, bytes_accessed=bytes_accessed),
    )(idx, x, w1c, emb_folded, b1, w2, b2, w3, b3)

    return out[:B, :output_size]


# ---------------------------------------------------------------------------
# QNetwork: parameter setup (incl. embedding fold + lane padding) + forward
# ---------------------------------------------------------------------------
class QNetworkPallas:
    def __init__(self, input_size, output_size, cat_dims, embed_dim=4, *,
                 key=jax.random.PRNGKey(0)):
        self.cat_dims = list(cat_dims)
        self.embed_dim = embed_dim
        n_cat = len(cat_dims)
        self.n_cat = n_cat
        self.embed_output_size = n_cat * embed_dim
        self.n_cont = input_size - n_cat
        self.fc_input_size = self.n_cont + self.embed_output_size
        self.output_size = output_size
        self.hidden = 20

        keys = jax.random.split(key, n_cat + 6)
        # Embedding tables ~ N(0,1), like nn.Embedding default init.
        self.embeddings = [
            jax.random.normal(keys[i], (cat_dims[i], embed_dim), jnp.float32)
            for i in range(n_cat)
        ]

        def linear_init(kw, kb, fan_in, fan_out):
            bound = 1.0 / (float(fan_in) ** 0.5)   # nn.Linear default init
            w = jax.random.uniform(kw, (fan_in, fan_out), jnp.float32,
                                   -bound, bound)          # stored (in, out)
            b = jax.random.uniform(kb, (1, fan_out), jnp.float32, -bound, bound)
            return w, b

        k = n_cat
        self.w1, self.b1 = linear_init(keys[k + 0], keys[k + 1],
                                       self.fc_input_size, self.hidden)
        self.w2, self.b2 = linear_init(keys[k + 2], keys[k + 3],
                                       self.hidden, self.hidden)
        self.w3, self.b3 = linear_init(keys[k + 4], keys[k + 5],
                                       self.hidden, output_size)

        # ---- derive the fused / padded kernel parameters ---------------------
        H = self.hidden
        Hp = _round_up(H, LANE)
        Op = _round_up(output_size, LANE)
        V = sum(self.cat_dims)
        Vp = _round_up(max(V, 1), LANE)

        # Fold each embedding table into its slice of the layer-1 weights.
        w1_cont = self.w1[: self.n_cont, :]                      # (n_cont, H)
        folded = []
        for i, emb in enumerate(self.embeddings):
            rows = self.w1[self.n_cont + i * embed_dim:
                           self.n_cont + (i + 1) * embed_dim, :]  # (embed_dim, H)
            folded.append(jnp.dot(emb, rows,
                                  precision=jax.lax.Precision.HIGHEST))
        folded = jnp.concatenate(folded, axis=0)                  # (V, H)

        offs, acc = [], 0
        for d in self.cat_dims:
            offs.append(acc)
            acc += d
        self.offsets = tuple(offs)

        def pad2(a, r, c):
            return jnp.pad(a, ((0, r - a.shape[0]), (0, c - a.shape[1])))

        self.k_w1c = pad2(w1_cont, self.n_cont, Hp)
        self.k_emb = pad2(folded, Vp, Hp)
        self.k_b1 = pad2(self.b1, 1, Hp)
        self.k_w2 = pad2(self.w2, Hp, Hp)
        self.k_b2 = pad2(self.b2, 1, Hp)
        self.k_w3 = pad2(self.w3, Hp, Op)
        self.k_b3 = pad2(self.b3, 1, Op)
        # TODO(synk): out-of-range categorical indices silently contribute zero
        # here (PyTorch nn.Embedding would raise); inputs are assumed in range.

    def __call__(self, x, cat_features):
        if cat_features.ndim == 1:
            cat_features = cat_features[None, :]
        if x.ndim == 1:
            x = x[None, :]
        return _fused_forward(cat_features.astype(jnp.int32),
                              x.astype(jnp.float32),
                              self.k_w1c, self.k_emb, self.k_b1,
                              self.k_w2, self.k_b2, self.k_w3, self.k_b3,
                              self.offsets, self.output_size)


# ---------------------------------------------------------------------------
# Reference forward in plain JAX (unfolded / unpadded params).
# ---------------------------------------------------------------------------
def reference_forward(net, x, cat_features):
    if cat_features.ndim == 1:
        cat_features = cat_features[None, :]
    if x.ndim == 1:
        x = x[None, :]
    embedded = [jnp.take(emb, cat_features[:, i], axis=0)
                for i, emb in enumerate(net.embeddings)]
    x_full = jnp.concatenate([x.astype(jnp.float32)] + embedded, axis=1)
    h = jnp.maximum(x_full @ net.w1 + net.b1, 0.0)
    h = jnp.maximum(h @ net.w2 + net.b2, 0.0)
    return h @ net.w3 + net.b3


if __name__ == "__main__":
    input_size = 16
    cat_dims = [5, 7, 3]
    output_size = 4
    embed_dim = 4
    n_cont = input_size - len(cat_dims)  # 13

    net = QNetworkPallas(input_size, output_size, cat_dims, embed_dim,
                         key=jax.random.PRNGKey(0))

    def make_inputs(batch, seed):
        key = jax.random.PRNGKey(seed)
        kx, *kc = jax.random.split(key, 1 + len(cat_dims))
        xs = jax.random.normal(kx, (batch, n_cont), jnp.float32)
        cats = jnp.stack(
            [jax.random.randint(kc[i], (batch,), 0, cat_dims[i], jnp.int32)
             for i in range(len(cat_dims))], axis=1)
        return xs, cats

    # Small batch (single block, grid=(1,)).
    x, cat = make_inputs(8, 0)
    out = jax.block_until_ready(net(x, cat))
    ref = jax.block_until_ready(reference_forward(net, x, cat))
    assert out.shape == (8, output_size)
    assert jnp.allclose(out, ref, atol=1e-4, rtol=1e-4), "mismatch vs reference (B=8)"

    # Larger batch: exercises the batch grid, row padding and parallel axis.
    xl, catl = make_inputs(1030, 1)
    outl = jax.block_until_ready(net(xl, catl))
    refl = jax.block_until_ready(reference_forward(net, xl, catl))
    assert outl.shape == (1030, output_size)
    assert jnp.allclose(outl, refl, atol=1e-4, rtol=1e-4), "mismatch vs reference (B=1030)"

    print("KERNEL_OK")
</pallas_src>

<mosaic_0001>
module attributes {stable_mosaic.version = 11 : i64} {
  func.func @_qnet_fused_kernel(%arg0: i32, %arg1: memref<8x3xi32, #tpu.memory_space<vmem>>, %arg2: memref<8x13xf32, #tpu.memory_space<vmem>>, %arg3: memref<13x128xf32, #tpu.memory_space<vmem>>, %arg4: memref<128x128xf32, #tpu.memory_space<vmem>>, %arg5: memref<1x128xf32, #tpu.memory_space<vmem>>, %arg6: memref<128x128xf32, #tpu.memory_space<vmem>>, %arg7: memref<1x128xf32, #tpu.memory_space<vmem>>, %arg8: memref<128x128xf32, #tpu.memory_space<vmem>>, %arg9: memref<1x128xf32, #tpu.memory_space<vmem>>, %arg10: memref<8x128xf32, #tpu.memory_space<vmem>>) attributes {dimension_semantics = [#tpu.dimension_semantics<parallel>], iteration_bounds = array<i64: 1>, scalar_prefetch = 0 : i64, scratch_operands = 0 : i64, tpu.core_type = #tpu.core_type<tc>, window_params = [{transform_indices = @transform_0, window_bounds = array<i64: 8, 3>}, {transform_indices = @transform_1, window_bounds = array<i64: 8, 13>}, {pipeline_mode = #tpu.pipeline_mode<synchronous>, transform_indices = @transform_2, window_bounds = array<i64: 13, 128>}, {pipeline_mode = #tpu.pipeline_mode<synchronous>, transform_indices = @transform_3, window_bounds = array<i64: 128, 128>}, {pipeline_mode = #tpu.pipeline_mode<synchronous>, transform_indices = @transform_4, window_bounds = array<i64: 1, 128>}, {pipeline_mode = #tpu.pipeline_mode<synchronous>, transform_indices = @transform_5, window_bounds = array<i64: 128, 128>}, {pipeline_mode = #tpu.pipeline_mode<synchronous>, transform_indices = @transform_6, window_bounds = array<i64: 1, 128>}, {pipeline_mode = #tpu.pipeline_mode<synchronous>, transform_indices = @transform_7, window_bounds = array<i64: 128, 128>}, {pipeline_mode = #tpu.pipeline_mode<synchronous>, transform_indices = @transform_8, window_bounds = array<i64: 1, 128>}, {transform_indices = @transform_9, window_bounds = array<i64: 8, 128>}]} {
    %c0 = arith.constant 0 : index
    %c0_0 = arith.constant 0 : index
    %0 = vector.load %arg2[%c0, %c0_0] : memref<8x13xf32, #tpu.memory_space<vmem>>, vector<8x13xf32>
    %c0_1 = arith.constant 0 : index
    %c0_2 = arith.constant 0 : index
    %1 = vector.load %arg1[%c0_1, %c0_2] : memref<8x3xi32, #tpu.memory_space<vmem>>, vector<8x3xi32>
    %c0_3 = arith.constant 0 : index
    %c0_4 = arith.constant 0 : index
    %2 = vector.load %arg3[%c0_3, %c0_4] : memref<13x128xf32, #tpu.memory_space<vmem>>, vector<13x128xf32>
    %cst = arith.constant dense<0.000000e+00> : vector<8x128xf32>
    %3 = tpu.matmul %0, %2, %cst {dimension_numbers = #tpu.dot_dimension_numbers<[1], [0], [0], [1], [0, 0, 1, 1], [], []>} : vector<8x13xf32>, vector<13x128xf32>, vector<8x128xf32> -> vector<8x128xf32>
    %4 = tpu.iota {dimensions = array<i32: 1>} : vector<8x128xi32>
    %cst_5 = arith.constant 0.000000e+00 : f32
    %5 = vector.broadcast %cst_5 : f32 to vector<8x128xf32>
    %6 = vector.extract_strided_slice %1 {offsets = [0, 0], sizes = [8, 1], strides = [1, 1]} : vector<8x3xi32> to vector<8x1xi32>
    %c0_i32 = arith.constant 0 : i32
    %7 = vector.broadcast %c0_i32 : i32 to vector<8x1xi32>
    %8 = arith.addi %6, %7 : vector<8x1xi32>
    %9 = vector.broadcast %8 : vector<8x1xi32> to vector<8x128xi32>
    %10 = arith.cmpi eq, %9, %4 : vector<8x128xi32>
    %11 = arith.extui %10 : vector<8x128xi1> to vector<8x128xi32>
    %12 = arith.sitofp %11 : vector<8x128xi32> to vector<8x128xf32>
    %13 = arith.addf %5, %12 : vector<8x128xf32>
    %14 = vector.extract_strided_slice %1 {offsets = [0, 1], sizes = [8, 1], strides = [1, 1]} : vector<8x3xi32> to vector<8x1xi32>
    %c5_i32 = arith.constant 5 : i32
    %15 = vector.broadcast %c5_i32 : i32 to vector<8x1xi32>
    %16 = arith.addi %14, %15 : vector<8x1xi32>
    %17 = vector.broadcast %16 : vector<8x1xi32> to vector<8x128xi32>
    %18 = arith.cmpi eq, %17, %4 : vector<8x128xi32>
    %19 = arith.extui %18 : vector<8x128xi1> to vector<8x128xi32>
    %20 = arith.sitofp %19 : vector<8x128xi32> to vector<8x128xf32>
    %21 = arith.addf %13, %20 : vector<8x128xf32>
    %22 = vector.extract_strided_slice %1 {offsets = [0, 2], sizes = [8, 1], strides = [1, 1]} : vector<8x3xi32> to vector<8x1xi32>
    %c12_i32 = arith.constant 12 : i32
    %23 = vector.broadcast %c12_i32 : i32 to vector<8x1xi32>
    %24 = arith.addi %22, %23 : vector<8x1xi32>
    %25 = vector.broadcast %24 : vector<8x1xi32> to vector<8x128xi32>
    %26 = arith.cmpi eq, %25, %4 : vector<8x128xi32>
    %27 = arith.extui %26 : vector<8x128xi1> to vector<8x128xi32>
    %28 = arith.sitofp %27 : vector<8x128xi32> to vector<8x128xf32>
    %29 = arith.addf %21, %28 : vector<8x128xf32>
    %c0_6 = arith.constant 0 : index
    %c0_7 = arith.constant 0 : index
    %30 = vector.load %arg4[%c0_6, %c0_7] : memref<128x128xf32, #tpu.memory_space<vmem>>, vector<128x128xf32>
    %cst_8 = arith.constant dense<0.000000e+00> : vector<8x128xf32>
    %31 = tpu.matmul %29, %30, %cst_8 {dimension_numbers = #tpu.dot_dimension_numbers<[1], [0], [0], [1], [0, 0, 1, 1], [], []>} : vector<8x128xf32>, vector<128x128xf32>, vector<8x128xf32> -> vector<8x128xf32>
    %32 = arith.addf %3, %31 : vector<8x128xf32>
    %c0_9 = arith.constant 0 : index
    %c0_10 = arith.constant 0 : index
    %33 = vector.load %arg5[%c0_9, %c0_10] : memref<1x128xf32, #tpu.memory_space<vmem>>, vector<1x128xf32>
    %34 = vector.broadcast %33 : vector<1x128xf32> to vector<8x128xf32>
    %35 = arith.addf %32, %34 : vector<8x128xf32>
    %cst_11 = arith.constant 0.000000e+00 : f32
    %36 = vector.broadcast %cst_11 : f32 to vector<8x128xf32>
    %37 = arith.maximumf %35, %36 : vector<8x128xf32>
    %c0_12 = arith.constant 0 : index
    %c0_13 = arith.constant 0 : index
    %38 = vector.load %arg6[%c0_12, %c0_13] : memref<128x128xf32, #tpu.memory_space<vmem>>, vector<128x128xf32>
    %cst_14 = arith.constant dense<0.000000e+00> : vector<8x128xf32>
    %39 = tpu.matmul %37, %38, %cst_14 {dimension_numbers = #tpu.dot_dimension_numbers<[1], [0], [0], [1], [0, 0, 1, 1], [], []>} : vector<8x128xf32>, vector<128x128xf32>, vector<8x128xf32> -> vector<8x128xf32>
    %c0_15 = arith.constant 0 : index
    %c0_16 = arith.constant 0 : index
    %40 = vector.load %arg7[%c0_15, %c0_16] : memref<1x128xf32, #tpu.memory_space<vmem>>, vector<1x128xf32>
    %41 = vector.broadcast %40 : vector<1x128xf32> to vector<8x128xf32>
    %42 = arith.addf %39, %41 : vector<8x128xf32>
    %cst_17 = arith.constant 0.000000e+00 : f32
    %43 = vector.broadcast %cst_17 : f32 to vector<8x128xf32>
    %44 = arith.maximumf %42, %43 : vector<8x128xf32>
    %c0_18 = arith.constant 0 : index
    %c0_19 = arith.constant 0 : index
    %45 = vector.load %arg8[%c0_18, %c0_19] : memref<128x128xf32, #tpu.memory_space<vmem>>, vector<128x128xf32>
    %cst_20 = arith.constant dense<0.000000e+00> : vector<8x128xf32>
    %46 = tpu.matmul %44, %45, %cst_20 {dimension_numbers = #tpu.dot_dimension_numbers<[1], [0], [0], [1], [0, 0, 1, 1], [], []>} : vector<8x128xf32>, vector<128x128xf32>, vector<8x128xf32> -> vector<8x128xf32>
    %c0_21 = arith.constant 0 : index
    %c0_22 = arith.constant 0 : index
    %47 = vector.load %arg9[%c0_21, %c0_22] : memref<1x128xf32, #tpu.memory_space<vmem>>, vector<1x128xf32>
    %48 = vector.broadcast %47 : vector<1x128xf32> to vector<8x128xf32>
    %49 = arith.addf %46, %48 : vector<8x128xf32>
    %c0_23 = arith.constant 0 : index
    %c0_24 = arith.constant 0 : index
    %50 = vector.load %arg10[%c0_23, %c0_24] : memref<8x128xf32, #tpu.memory_space<vmem>>, vector<8x128xf32>
    tpu.vector_store %arg10[%c0_23, %c0_24], %49 {strides = array<i32>} : memref<8x128xf32, #tpu.memory_space<vmem>>, vector<8x128xf32>,
    return
  }
  func.func @transform_0(%arg0: i32) -> (i32, i32) {
    %c0_i32 = arith.constant 0 : i32
    %c0_i32_0 = arith.constant 0 : i32
    return %arg0, %c0_i32 : i32, i32
  }
  func.func @transform_1(%arg0: i32) -> (i32, i32) {
    %c0_i32 = arith.constant 0 : i32
    %c0_i32_0 = arith.constant 0 : i32
    return %arg0, %c0_i32 : i32, i32
  }
  func.func @transform_2(%arg0: i32) -> (i32, i32) {
    %c0_i32 = arith.constant 0 : i32
    %c0_i32_0 = arith.constant 0 : i32
    %c0_i32_1 = arith.constant 0 : i32
    return %c0_i32, %c0_i32_0 : i32, i32
  }
  func.func @transform_3(%arg0: i32) -> (i32, i32) {
    %c0_i32 = arith.constant 0 : i32
    %c0_i32_0 = arith.constant 0 : i32
    %c0_i32_1 = arith.constant 0 : i32
    return %c0_i32, %c0_i32_0 : i32, i32
  }
  func.func @transform_4(%arg0: i32) -> (i32, i32) {
    %c0_i32 = arith.constant 0 : i32
    %c0_i32_0 = arith.constant 0 : i32
    %c0_i32_1 = arith.constant 0 : i32
    return %c0_i32, %c0_i32_0 : i32, i32
  }
  func.func @transform_5(%arg0: i32) -> (i32, i32) {
    %c0_i32 = arith.constant 0 : i32
    %c0_i32_0 = arith.constant 0 : i32
    %c0_i32_1 = arith.constant 0 : i32
    return %c0_i32, %c0_i32_0 : i32, i32
  }
  func.func @transform_6(%arg0: i32) -> (i32, i32) {
    %c0_i32 = arith.constant 0 : i32
    %c0_i32_0 = arith.constant 0 : i32
    %c0_i32_1 = arith.constant 0 : i32
    return %c0_i32, %c0_i32_0 : i32, i32
  }
  func.func @transform_7(%arg0: i32) -> (i32, i32) {
    %c0_i32 = arith.constant 0 : i32
    %c0_i32_0 = arith.constant 0 : i32
    %c0_i32_1 = arith.constant 0 : i32
    return %c0_i32, %c0_i32_0 : i32, i32
  }
  func.func @transform_8(%arg0: i32) -> (i32, i32) {
    %c0_i32 = arith.constant 0 : i32
    %c0_i32_0 = arith.constant 0 : i32
    %c0_i32_1 = arith.constant 0 : i32
    return %c0_i32, %c0_i32_0 : i32, i32
  }
  func.func @transform_9(%arg0: i32) -> (i32, i32) {
    %c0_i32 = arith.constant 0 : i32
    %c0_i32_0 = arith.constant 0 : i32
    return %arg0, %c0_i32 : i32, i32
  }
}

</mosaic_0001>

<llo_original>
// kernel: tpu_custom_call.1
$region0: #{tpu_custom_call.1}
  #allocation0 [shape = 'u32[]', space=smem, size = 0x4, offset = 0x4, fixed_abs, tag = 'smem constant byte address 0x4 - core index']
  #allocation1 [shape = 'u32[144,128]{1,0:T(1,128)}', space=vmem, size = 0x12000, scoped, tag = 'internal scratch']
  %s0 = inlined_call_operand.vmem [shape: s32[8,3], index: 0, kind: input, shape index: {}]
  %s1 = inlined_call_operand.hbm [shape: f32[8,13], index: 1, kind: input, shape index: {}]
  %s2 = inlined_call_operand.vmem [shape: f32[13,128], index: 2, kind: input, shape index: {}]
  %s3 = inlined_call_operand.hbm [shape: f32[128,128], index: 3, kind: input, shape index: {}]
  %s4 = inlined_call_operand.vmem [shape: f32[1,128], index: 4, kind: input, shape index: {}]
  %s5 = inlined_call_operand.hbm [shape: f32[128,128], index: 5, kind: input, shape index: {}]
  %s6 = inlined_call_operand.vmem [shape: f32[1,128], index: 6, kind: input, shape index: {}]
  %s7 = inlined_call_operand.hbm [shape: f32[128,128], index: 7, kind: input, shape index: {}]
  %s8 = inlined_call_operand.vmem [shape: f32[1,128], index: 8, kind: input, shape index: {}]
  %s9 = inlined_call_operand.hbm [shape: f32[8,128], index: 9, kind: output, shape index: {}]
  %s10 = sld [smem:[#allocation0]]
  $region62: #{tpu_custom_call.1} parent=0
    _
  %s12 = ssub.s32 1, %s10
  %s13 = scalar_select 0, %s12, %s10
  $region1: #{tpu_custom_call.1} parent=0
    #allocation2 [shape = 'u8[4096]{0}', space=vmem, size = 0x1000, scoped, tag = 'input window, operand 1, single buffered']
    #allocation3 [shape = 's32[1]{0}', space=sflag, size = 0x4, scoped, tag = 'scoped memory for tpu_custom_call.1']
    #allocation4 [shape = 's32[1]{0}', space=sflag, size = 0x4, scoped, tag = 'scoped memory for tpu_custom_call.1']
    #allocation5 [shape = 'u8[65536]{0}', space=vmem, size = 0x10000, scoped, tag = 'input window, operand 3, single buffered']
    #allocation6 [shape = 's32[1]{0}', space=sflag, size = 0x4, scoped, tag = 'scoped memory for tpu_custom_call.1']
    #allocation7 [shape = 'u8[65536]{0}', space=vmem, size = 0x10000, scoped, tag = 'input window, operand 5, single buffered']
    #allocation8 [shape = 'u8[65536]{0}', space=vmem, size = 0x10000, scoped, tag = 'input window, operand 7, single buffered']
    #allocation9 [shape = 's32[1]{0}', space=sflag, size = 0x4, scoped, tag = 'scoped memory for tpu_custom_call.1']
    #allocation10 [shape = 'u8[4096]{0}', space=vmem, size = 0x1000, scoped, tag = 'output window, operand 0, single buffered']
    %14 = vsyncpa [#allocation3], 0
    %15 = vsyncpa [#allocation6], 0
    %16 = vsyncpa [#allocation9], 0
    %17 = vsyncpa [#allocation4], 0
    // Predicated region
    $region2: #{tpu_custom_call.1} parent=1 // pred_check
      _
    $region3: #{tpu_custom_call.1} parent=1 // pred_check_branch
      %19 = sbr.rel (0) target = $region5
    $region4: #{tpu_custom_call.1} parent=1 // pred_region
      _
    $region5: #{tpu_custom_call.1} parent=1 // pred_fallthru
      _
    // Predicated region
    $region6: #{tpu_custom_call.1} parent=1 // pred_check
      _
    $region7: #{tpu_custom_call.1} parent=1 // pred_check_branch
      %21 = sbr.rel (0) target = $region9
    $region8: #{tpu_custom_call.1} parent=1 // pred_region
      %s23 = ssub.s32 128, 128
      %24 = vsyncadd [#allocation3], %s23
      %s26 = sshll.u32 [#allocation2], 4
      %s27 = int_to_ptr.vmem [resolvable:$true] %s26
      %29 = dma.hbm_to_vmem [thread:$0]  %s1, 128, %s27, [#allocation3]
    $region9: #{tpu_custom_call.1} parent=1 // pred_fallthru
      _
    // Predicated region
    $region10: #{tpu_custom_call.1} parent=1 // pred_check
      _
    $region11: #{tpu_custom_call.1} parent=1 // pred_check_branch
      %31 = sbr.rel (0) target = $region13
    $region12: #{tpu_custom_call.1} parent=1 // pred_region
      _
    $region13: #{tpu_custom_call.1} parent=1 // pred_fallthru
      _
    // Predicated region
    $region14: #{tpu_custom_call.1} parent=1 // pred_check
      _
    $region15: #{tpu_custom_call.1} parent=1 // pred_check_branch
      %33 = sbr.rel (0) target = $region17
    $region16: #{tpu_custom_call.1} parent=1 // pred_region
      %s35 = ssub.s32 2048, 2048
      %36 = vsyncadd [#allocation6], %s35
      %s37 = sshll.u32 [#allocation5], 4
      %s38 = int_to_ptr.vmem [resolvable:$true] %s37
      %43 = dma.hbm_to_vmem [thread:$0]  %s3, 2048, %s38, [#allocation6], 128, 128, 8
    $region17: #{tpu_custom_call.1} parent=1 // pred_fallthru
      _
    // Predicated region
    $region18: #{tpu_custom_call.1} parent=1 // pred_check
      _
    $region19: #{tpu_custom_call.1} parent=1 // pred_check_branch
      %45 = sbr.rel (0) target = $region21
    $region20: #{tpu_custom_call.1} parent=1 // pred_region
      _
    $region21: #{tpu_custom_call.1} parent=1 // pred_fallthru
      _
    // Predicated region
    $region22: #{tpu_custom_call.1} parent=1 // pred_check
      _
    $region23: #{tpu_custom_call.1} parent=1 // pred_check_branch
      %47 = sbr.rel (0) target = $region25
    $region24: #{tpu_custom_call.1} parent=1 // pred_region
      %s49 = ssub.s32 2048, 2048
      %50 = vsyncadd [#allocation6], %s49
      %s51 = sshll.u32 [#allocation7], 4
      %s52 = int_to_ptr.vmem [resolvable:$true] %s51
      %57 = dma.hbm_to_vmem [thread:$0]  %s5, 2048, %s52, [#allocation6], 128, 128, 8
    $region25: #{tpu_custom_call.1} parent=1 // pred_fallthru
      _
    // Predicated region
    $region26: #{tpu_custom_call.1} parent=1 // pred_check
      _
    $region27: #{tpu_custom_call.1} parent=1 // pred_check_branch
      %59 = sbr.rel (0) target = $region29
    $region28: #{tpu_custom_call.1} parent=1 // pred_region
      _
    $region29: #{tpu_custom_call.1} parent=1 // pred_fallthru
      _
    // Predicated region
    $region30: #{tpu_custom_call.1} parent=1 // pred_check
      _
    $region31: #{tpu_custom_call.1} parent=1 // pred_check_branch
      %61 = sbr.rel (0) target = $region33
    $region32: #{tpu_custom_call.1} parent=1 // pred_region
      %s63 = ssub.s32 2048, 2048
      %64 = vsyncadd [#allocation9], %s63
      %s65 = sshll.u32 [#allocation8], 4
      %s66 = int_to_ptr.vmem [resolvable:$true] %s65
      %71 = dma.hbm_to_vmem [thread:$0]  %s7, 2048, %s66, [#allocation9], 128, 128, 8
    $region33: #{tpu_custom_call.1} parent=1 // pred_fallthru
      _
    // Predicated region
    $region34: #{tpu_custom_call.1} parent=1 // pred_check
      _
    $region35: #{tpu_custom_call.1} parent=1 // pred_check_branch
      %73 = sbr.rel (0) target = $region37
    $region36: #{tpu_custom_call.1} parent=1 // pred_region
      _
    $region37: #{tpu_custom_call.1} parent=1 // pred_fallthru
      _
    // Predicated region
    $region38: #{tpu_custom_call.1} parent=1 // pred_check
      _
    $region39: #{tpu_custom_call.1} parent=1 // pred_check_branch
      %75 = sbr.rel (0) target = $region41
    $region40: #{tpu_custom_call.1} parent=1 // pred_region
      %76 = dma.done [#allocation3], 128
    $region41: #{tpu_custom_call.1} parent=1 // pred_fallthru
      _
    // Predicated region
    $region42: #{tpu_custom_call.1} parent=1 // pred_check
      _
    $region43: #{tpu_custom_call.1} parent=1 // pred_check_branch
      %78 = sbr.rel (0) target = $region45
    $region44: #{tpu_custom_call.1} parent=1 // pred_region
      %79 = dma.done [#allocation6], 2048
    $region45: #{tpu_custom_call.1} parent=1 // pred_fallthru
      _
    // Predicated region
    $region46: #{tpu_custom_call.1} parent=1 // pred_check
      _
    $region47: #{tpu_custom_call.1} parent=1 // pred_check_branch
      %81 = sbr.rel (0) target = $region49
    $region48: #{tpu_custom_call.1} parent=1 // pred_region
      %82 = dma.done [#allocation6], 2048
    $region49: #{tpu_custom_call.1} parent=1 // pred_fallthru
      _
    // Predicated region
    $region50: #{tpu_custom_call.1} parent=1 // pred_check
      _
    $region51: #{tpu_custom_call.1} parent=1 // pred_check_branch
      %84 = sbr.rel (0) target = $region53
    $region52: #{tpu_custom_call.1} parent=1 // pred_region
      %85 = dma.done [#allocation9], 2048
    $region53: #{tpu_custom_call.1} parent=1 // pred_fallthru
      _
    %v86 = vld [vmem:[#allocation2] sm:$0xff]
    %v87 = vld [vmem:[%s0] sm:$0xff]
    %v88 = vld [vmem:[%s2] sm:$0xff]
    %v89 = vld [vmem:[%s2 + $0x8] sm:$0x1f]
    %v90 = vlaneseq
    %v91 = vand.u32 %v90, 127
    %92 = vset.pattern.permute.xlu0 0
    %93 = vperm.xlu0 %92, %v87
    %v94 = vpop.permute.xlu0 %93
    %vm95 = vcmp.eq.s32.totalorder %v94, %v91
    %v96 = vsel %vm95, 1, 0
    %v97 = vcvt.s32.f32 %v96
    %v98 = vadd.f32 %v97, 0.0
    %v99 = vadd.s32 %v87, 5
    %100 = vset.pattern.permute.xlu0 1
    %101 = vperm.xlu0 %100, %v99
    %v102 = vpop.permute.xlu0 %101
    %vm103 = vcmp.eq.s32.totalorder %v102, %v91
    %v104 = vsel %vm103, 1, 0
    %v105 = vcvt.s32.f32 %v104
    %v106 = vadd.f32 %v98, %v105
    %v107 = vadd.s32 %v87, 12
    %108 = vset.pattern.permute.xlu0 2
    %109 = vperm.xlu0 %108, %v107
    %v110 = vpop.permute.xlu0 %109
    %vm111 = vcmp.eq.s32.totalorder %v110, %v91
    %v112 = vsel %vm111, 1, 0
    %v113 = vcvt.s32.f32 %v112
    %v114 = vadd.f32 %v106, %v113
    %v115 = vld [vmem:[#allocation5] sm:$0xff]
    %v116 = vld [vmem:[#allocation5 + $0x8] sm:$0xff]
    %v117 = vld [vmem:[#allocation5 + $0x10] sm:$0xff]
    %v118 = vld [vmem:[#allocation5 + $0x18] sm:$0xff]
    %v119 = vld [vmem:[#allocation5 + $0x20] sm:$0xff]
    %v120 = vld [vmem:[#allocation5 + $0x28] sm:$0xff]
    %v121 = vld [vmem:[#allocation5 + $0x30] sm:$0xff]
    %v122 = vld [vmem:[#allocation5 + $0x38] sm:$0xff]
    %v123 = vld [vmem:[#allocation5 + $0x40] sm:$0xff]
    %v124 = vld [vmem:[#allocation5 + $0x48] sm:$0xff]
    %v125 = vld [vmem:[#allocation5 + $0x50] sm:$0xff]
    %v126 = vld [vmem:[#allocation5 + $0x58] sm:$0xff]
    %v127 = vld [vmem:[#allocation5 + $0x60] sm:$0xff]
    %v128 = vld [vmem:[#allocation5 + $0x68] sm:$0xff]
    %v129 = vld [vmem:[#allocation5 + $0x70] sm:$0xff]
    %v130 = vld [vmem:[#allocation5 + $0x78] sm:$0xff]
    %131 = vmatprep.subr.mxu0 0.0
    %132 = vmatpush1.msra.mxu0 %v115
    %133 = vmatprep.subr.mxu0 0.0
    %134 = vmatpush1.msra.mxu0 %v116
    %135 = vmatprep.subr.mxu0 0.0
    %136 = vmatpush1.msra.mxu0 %v117
    %137 = vmatprep.subr.mxu0 0.0
    %138 = vmatpush1.msra.mxu0 %v118
    %139 = vmatprep.subr.mxu0 0.0
    %140 = vmatpush1.msra.mxu0 %v119
    %141 = vmatprep.subr.mxu0 0.0
    %142 = vmatpush1.msra.mxu0 %v120
    %143 = vmatprep.subr.mxu0 0.0
    %144 = vmatpush1.msra.mxu0 %v121
    %145 = vmatprep.subr.mxu0 0.0
    %146 = vmatpush1.msra.mxu0 %v122
    %147 = vmatprep.subr.mxu0 0.0
    %148 = vmatpush1.msra.mxu0 %v123
    %149 = vmatprep.subr.mxu0 0.0
    %150 = vmatpush1.msra.mxu0 %v124
    %151 = vmatprep.subr.mxu0 0.0
    %152 = vmatpush1.msra.mxu0 %v125
    %153 = vmatprep.subr.mxu0 0.0
    %154 = vmatpush1.msra.mxu0 %v126
    %155 = vmatprep.subr.mxu0 0.0
    %156 = vmatpush1.msra.mxu0 %v127
    %157 = vmatprep.subr.mxu0 0.0
    %158 = vmatpush1.msra.mxu0 %v128
    %159 = vmatprep.subr.mxu0 0.0
    %160 = vmatpush1.msra.mxu0 %v129
    %161 = vmatprep.subr.mxu0 0.0
    %162 = vmatpush1.msra.mxu0 %v130
    %163 = vmatprep.subr.mxu0 0.0
    %164 = vmatpush1.msra.mxu0 0.0
    %165 = vmatprep.subr.mxu0 0.0
    %166 = vmatpush1.msra.mxu0 0.0
    %167 = vmatprep.subr.mxu0 0.0
    %168 = vmatpush1.msra.mxu0 0.0
    %169 = vmatprep.subr.mxu0 0.0
    %170 = vmatpush1.msra.mxu0 0.0
    %171 = vmatprep.subr.mxu0 0.0
    %172 = vmatpush1.msra.mxu0 0.0
    %173 = vmatprep.subr.mxu0 0.0
    %174 = vmatpush1.msra.mxu0 0.0
    %175 = vmatprep.subr.mxu0 0.0
    %176 = vmatpush1.msra.mxu0 0.0
    %177 = vmatprep.subr.mxu0 0.0
    %178 = vmatpush1.msra.mxu0 0.0
    %179 = vmatprep.subr.mxu0 0.0
    %180 = vmatpush1.msra.mxu0 0.0
    %181 = vmatprep.subr.mxu0 0.0
    %182 = vmatpush1.msra.mxu0 0.0
    %183 = vmatprep.subr.mxu0 0.0
    %184 = vmatpush1.msra.mxu0 0.0
    %185 = vmatprep.subr.mxu0 0.0
    %186 = vmatpush1.msra.mxu0 0.0
    %187 = vmatprep.subr.mxu0 0.0
    %188 = vmatpush1.msra.mxu0 0.0
    %189 = vmatprep.subr.mxu0 0.0
    %190 = vmatpush1.msra.mxu0 0.0
    %191 = vmatprep.subr.mxu0 0.0
    %192 = vmatpush1.msra.mxu0 0.0
    %193 = vmatprep.subr.mxu0 0.0
    %194 = vmatpush1.msra.mxu0 0.0
    %195 = vmatprep.mubr.f32.mxu0 0.0
    %196 = vmatmul.mubr.f32.gmra.mrb[0].mxu0 %v114
    %v197 = vpop.f32.mrb[0].mxu0
    %v198 = vadd.f32 0.0, %v197
    %v199 = vpop.f32.mrb[0].mxu0
    %200 = vdwg.mxu0
    %vm201 = vcmask 105472
    %v203 = vsel %vm201, %v86, 0
    %vm205 = vcmask 1044480
    %v207 = vsel %vm205, %v89, 0
    %209 = vmatprep.subr.mxu0 0.0
    %210 = vmatpush1.msra.mxu0 %v88
    %211 = vmatprep.subr.mxu0 0.0
    %212 = vmatpush1.msra.mxu0 %v207
    %213 = vmatprep.subr.mxu0 0.0
    %214 = vmatpush1.msra.mxu0 0.0
    %215 = vmatprep.subr.mxu0 0.0
    %216 = vmatpush1.msra.mxu0 0.0
    %217 = vmatprep.subr.mxu0 0.0
    %218 = vmatpush1.msra.mxu0 0.0
    %219 = vmatprep.subr.mxu0 0.0
    %220 = vmatpush1.msra.mxu0 0.0
    %221 = vmatprep.subr.mxu0 0.0
    %222 = vmatpush1.msra.mxu0 0.0
    %223 = vmatprep.subr.mxu0 0.0
    %224 = vmatpush1.msra.mxu0 0.0
    %225 = vmatprep.subr.mxu0 0.0
    %226 = vmatpush1.msra.mxu0 0.0
    %227 = vmatprep.subr.mxu0 0.0
    %228 = vmatpush1.msra.mxu0 0.0
    %229 = vmatprep.subr.mxu0 0.0
    %230 = vmatpush1.msra.mxu0 0.0
    %231 = vmatprep.subr.mxu0 0.0
    %232 = vmatpush1.msra.mxu0 0.0
    %233 = vmatprep.subr.mxu0 0.0
    %234 = vmatpush1.msra.mxu0 0.0
    %235 = vmatprep.subr.mxu0 0.0
    %236 = vmatpush1.msra.mxu0 0.0
    %237 = vmatprep.subr.mxu0 0.0
    %238 = vmatpush1.msra.mxu0 0.0
    %239 = vmatprep.subr.mxu0 0.0
    %240 = vmatpush1.msra.mxu0 0.0
    %241 = vmatprep.subr.mxu0 0.0
    %242 = vmatpush1.msra.mxu0 0.0
    %243 = vmatprep.subr.mxu0 0.0
    %244 = vmatpush1.msra.mxu0 0.0
    %245 = vmatprep.subr.mxu0 0.0
    %246 = vmatpush1.msra.mxu0 0.0
    %247 = vmatprep.subr.mxu0 0.0
    %248 = vmatpush1.msra.mxu0 0.0
    %249 = vmatprep.subr.mxu0 0.0
    %250 = vmatpush1.msra.mxu0 0.0
    %251 = vmatprep.subr.mxu0 0.0
    %252 = vmatpush1.msra.mxu0 0.0
    %253 = vmatprep.subr.mxu0 0.0
    %254 = vmatpush1.msra.mxu0 0.0
    %255 = vmatprep.subr.mxu0 0.0
    %256 = vmatpush1.msra.mxu0 0.0
    %257 = vmatprep.subr.mxu0 0.0
    %258 = vmatpush1.msra.mxu0 0.0
    %259 = vmatprep.subr.mxu0 0.0
    %260 = vmatpush1.msra.mxu0 0.0
    %261 = vmatprep.subr.mxu0 0.0
    %262 = vmatpush1.msra.mxu0 0.0
    %263 = vmatprep.subr.mxu0 0.0
    %264 = vmatpush1.msra.mxu0 0.0
    %265 = vmatprep.subr.mxu0 0.0
    %266 = vmatpush1.msra.mxu0 0.0
    %267 = vmatprep.subr.mxu0 0.0
    %268 = vmatpush1.msra.mxu0 0.0
    %269 = vmatprep.subr.mxu0 0.0
    %270 = vmatpush1.msra.mxu0 0.0
    %271 = vmatprep.subr.mxu0 0.0
    %272 = vmatpush1.msra.mxu0 0.0
    %273 = vmatprep.mubr.f32.mxu0 0.0
    %274 = vmatmul.mubr.f32.gmra.mrb[0].mxu0 %v203
    %v275 = vpop.f32.mrb[0].mxu0
    %v276 = vadd.f32 %v198, %v275
    %v277 = vpop.f32.mrb[0].mxu0
    %278 = vdwg.mxu0
    %v279 = vld [vmem:[%s4] sm:$0x1]
    %v281 = vlaneseq
    %v282 = vshrl.u32 %v281, 7
    %v283 = vsub.s32 0, %v282
    %v284 = vrot.slane %v279, %v283
    %v286 = vadd.f32 %v276, %v284
    %v287 = vmax.f32 %v286, 0.0
    %v288 = vld [vmem:[#allocation7] sm:$0xff]
    %v289 = vld [vmem:[#allocation7 + $0x8] sm:$0xff]
    %v290 = vld [vmem:[#allocation7 + $0x10] sm:$0xff]
    %v291 = vld [vmem:[#allocation7 + $0x18] sm:$0xff]
    %v292 = vld [vmem:[#allocation7 + $0x20] sm:$0xff]
    %v293 = vld [vmem:[#allocation7 + $0x28] sm:$0xff]
    %v294 = vld [vmem:[#allocation7 + $0x30] sm:$0xff]
    %v295 = vld [vmem:[#allocation7 + $0x38] sm:$0xff]
    %v296 = vld [vmem:[#allocation7 + $0x40] sm:$0xff]
    %v297 = vld [vmem:[#allocation7 + $0x48] sm:$0xff]
    %v298 = vld [vmem:[#allocation7 + $0x50] sm:$0xff]
    %v299 = vld [vmem:[#allocation7 + $0x58] sm:$0xff]
    %v300 = vld [vmem:[#allocation7 + $0x60] sm:$0xff]
    %v301 = vld [vmem:[#allocation7 + $0x68] sm:$0xff]
    %v302 = vld [vmem:[#allocation7 + $0x70] sm:$0xff]
    %v303 = vld [vmem:[#allocation7 + $0x78] sm:$0xff]
    %v304 = vld [vmem:[%s6] sm:$0x1]
    %v306 = vlaneseq
    %v307 = vshrl.u32 %v306, 7
    %v308 = vsub.s32 0, %v307
    %v309 = vrot.slane %v304, %v308
    %311 = vmatprep.subr.mxu0 0.0
    %312 = vmatpush1.msra.mxu0 %v288
    %313 = vmatprep.subr.mxu0 0.0
    %314 = vmatpush1.msra.mxu0 %v289
    %315 = vmatprep.subr.mxu0 0.0
    %316 = vmatpush1.msra.mxu0 %v290
    %317 = vmatprep.subr.mxu0 0.0
    %318 = vmatpush1.msra.mxu0 %v291
    %319 = vmatprep.subr.mxu0 0.0
    %320 = vmatpush1.msra.mxu0 %v292
    %321 = vmatprep.subr.mxu0 0.0
    %322 = vmatpush1.msra.mxu0 %v293
    %323 = vmatprep.subr.mxu0 0.0
    %324 = vmatpush1.msra.mxu0 %v294
    %325 = vmatprep.subr.mxu0 0.0
    %326 = vmatpush1.msra.mxu0 %v295
    %327 = vmatprep.subr.mxu0 0.0
    %328 = vmatpush1.msra.mxu0 %v296
    %329 = vmatprep.subr.mxu0 0.0
    %330 = vmatpush1.msra.mxu0 %v297
    %331 = vmatprep.subr.mxu0 0.0
    %332 = vmatpush1.msra.mxu0 %v298
    %333 = vmatprep.subr.mxu0 0.0
    %334 = vmatpush1.msra.mxu0 %v299
    %335 = vmatprep.subr.mxu0 0.0
    %336 = vmatpush1.msra.mxu0 %v300
    %337 = vmatprep.subr.mxu0 0.0
    %338 = vmatpush1.msra.mxu0 %v301
    %339 = vmatprep.subr.mxu0 0.0
    %340 = vmatpush1.msra.mxu0 %v302
    %341 = vmatprep.subr.mxu0 0.0
    %342 = vmatpush1.msra.mxu0 %v303
    %343 = vmatprep.subr.mxu0 0.0
    %344 = vmatpush1.msra.mxu0 0.0
    %345 = vmatprep.subr.mxu0 0.0
    %346 = vmatpush1.msra.mxu0 0.0
    %347 = vmatprep.subr.mxu0 0.0
    %348 = vmatpush1.msra.mxu0 0.0
    %349 = vmatprep.subr.mxu0 0.0
    %350 = vmatpush1.msra.mxu0 0.0
    %351 = vmatprep.subr.mxu0 0.0
    %352 = vmatpush1.msra.mxu0 0.0
    %353 = vmatprep.subr.mxu0 0.0
    %354 = vmatpush1.msra.mxu0 0.0
    %355 = vmatprep.subr.mxu0 0.0
    %356 = vmatpush1.msra.mxu0 0.0
    %357 = vmatprep.subr.mxu0 0.0
    %358 = vmatpush1.msra.mxu0 0.0
    %359 = vmatprep.subr.mxu0 0.0
    %360 = vmatpush1.msra.mxu0 0.0
    %361 = vmatprep.subr.mxu0 0.0
    %362 = vmatpush1.msra.mxu0 0.0
    %363 = vmatprep.subr.mxu0 0.0
    %364 = vmatpush1.msra.mxu0 0.0
    %365 = vmatprep.subr.mxu0 0.0
    %366 = vmatpush1.msra.mxu0 0.0
    %367 = vmatprep.subr.mxu0 0.0
    %368 = vmatpush1.msra.mxu0 0.0
    %369 = vmatprep.subr.mxu0 0.0
    %370 = vmatpush1.msra.mxu0 0.0
    %371 = vmatprep.subr.mxu0 0.0
    %372 = vmatpush1.msra.mxu0 0.0
    %373 = vmatprep.subr.mxu0 0.0
    %374 = vmatpush1.msra.mxu0 0.0
    %375 = vmatprep.mubr.f32.mxu0 0.0
    %376 = vmatmul.mubr.f32.gmra.mrb[0].mxu0 %v287
    %v377 = vpop.f32.mrb[0].mxu0
    %v378 = vadd.f32 %v309, %v377
    %v379 = vpop.f32.mrb[0].mxu0
    %380 = vdwg.mxu0
    %v381 = vmax.f32 %v378, 0.0
    %v382 = vld [vmem:[#allocation8] sm:$0xff]
    %v383 = vld [vmem:[#allocation8 + $0x8] sm:$0xff]
    %v384 = vld [vmem:[#allocation8 + $0x10] sm:$0xff]
    %v385 = vld [vmem:[#allocation8 + $0x18] sm:$0xff]
    %v386 = vld [vmem:[#allocation8 + $0x20] sm:$0xff]
    %v387 = vld [vmem:[#allocation8 + $0x28] sm:$0xff]
    %v388 = vld [vmem:[#allocation8 + $0x30] sm:$0xff]
    %v389 = vld [vmem:[#allocation8 + $0x38] sm:$0xff]
    %v390 = vld [vmem:[#allocation8 + $0x40] sm:$0xff]
    %v391 = vld [vmem:[#allocation8 + $0x48] sm:$0xff]
    %v392 = vld [vmem:[#allocation8 + $0x50] sm:$0xff]
    %v393 = vld [vmem:[#allocation8 + $0x58] sm:$0xff]
    %v394 = vld [vmem:[#allocation8 + $0x60] sm:$0xff]
    %v395 = vld [vmem:[#allocation8 + $0x68] sm:$0xff]
    %v396 = vld [vmem:[#allocation8 + $0x70] sm:$0xff]
    %v397 = vld [vmem:[#allocation8 + $0x78] sm:$0xff]
    %v398 = vld [vmem:[%s8] sm:$0x1]
    %v400 = vlaneseq
    %v401 = vshrl.u32 %v400, 7
    %v402 = vsub.s32 0, %v401
    %v403 = vrot.slane %v398, %v402
    %405 = vmatprep.subr.mxu0 0.0
    %406 = vmatpush1.msra.mxu0 %v382
    %407 = vmatprep.subr.mxu0 0.0
    %408 = vmatpush1.msra.mxu0 %v383
    %409 = vmatprep.subr.mxu0 0.0
    %410 = vmatpush1.msra.mxu0 %v384
    %411 = vmatprep.subr.mxu0 0.0
    %412 = vmatpush1.msra.mxu0 %v385
    %413 = vmatprep.subr.mxu0 0.0
    %414 = vmatpush1.msra.mxu0 %v386
    %415 = vmatprep.subr.mxu0 0.0
    %416 = vmatpush1.msra.mxu0 %v387
    %417 = vmatprep.subr.mxu0 0.0
    %418 = vmatpush1.msra.mxu0 %v388
    %419 = vmatprep.subr.mxu0 0.0
    %420 = vmatpush1.msra.mxu0 %v389
    %421 = vmatprep.subr.mxu0 0.0
    %422 = vmatpush1.msra.mxu0 %v390
    %423 = vmatprep.subr.mxu0 0.0
    %424 = vmatpush1.msra.mxu0 %v391
    %425 = vmatprep.subr.mxu0 0.0
    %426 = vmatpush1.msra.mxu0 %v392
    %427 = vmatprep.subr.mxu0 0.0
    %428 = vmatpush1.msra.mxu0 %v393
    %429 = vmatprep.subr.mxu0 0.0
    %430 = vmatpush1.msra.mxu0 %v394
    %431 = vmatprep.subr.mxu0 0.0
    %432 = vmatpush1.msra.mxu0 %v395
    %433 = vmatprep.subr.mxu0 0.0
    %434 = vmatpush1.msra.mxu0 %v396
    %435 = vmatprep.subr.mxu0 0.0
    %436 = vmatpush1.msra.mxu0 %v397
    %437 = vmatprep.subr.mxu0 0.0
    %438 = vmatpush1.msra.mxu0 0.0
    %439 = vmatprep.subr.mxu0 0.0
    %440 = vmatpush1.msra.mxu0 0.0
    %441 = vmatprep.subr.mxu0 0.0
    %442 = vmatpush1.msra.mxu0 0.0
    %443 = vmatprep.subr.mxu0 0.0
    %444 = vmatpush1.msra.mxu0 0.0
    %445 = vmatprep.subr.mxu0 0.0
    %446 = vmatpush1.msra.mxu0 0.0
    %447 = vmatprep.subr.mxu0 0.0
    %448 = vmatpush1.msra.mxu0 0.0
    %449 = vmatprep.subr.mxu0 0.0
    %450 = vmatpush1.msra.mxu0 0.0
    %451 = vmatprep.subr.mxu0 0.0
    %452 = vmatpush1.msra.mxu0 0.0
    %453 = vmatprep.subr.mxu0 0.0
    %454 = vmatpush1.msra.mxu0 0.0
    %455 = vmatprep.subr.mxu0 0.0
    %456 = vmatpush1.msra.mxu0 0.0
    %457 = vmatprep.subr.mxu0 0.0
    %458 = vmatpush1.msra.mxu0 0.0
    %459 = vmatprep.subr.mxu0 0.0
    %460 = vmatpush1.msra.mxu0 0.0
    %461 = vmatprep.subr.mxu0 0.0
    %462 = vmatpush1.msra.mxu0 0.0
    %463 = vmatprep.subr.mxu0 0.0
    %464 = vmatpush1.msra.mxu0 0.0
    %465 = vmatprep.subr.mxu0 0.0
    %466 = vmatpush1.msra.mxu0 0.0
    %467 = vmatprep.subr.mxu0 0.0
    %468 = vmatpush1.msra.mxu0 0.0
    %469 = vmatprep.mubr.f32.mxu0 0.0
    %470 = vmatmul.mubr.f32.gmra.mrb[0].mxu0 %v381
    %v471 = vpop.f32.mrb[0].mxu0
    %v472 = vadd.f32 %v403, %v471
    %v473 = vpop.f32.mrb[0].mxu0
    %474 = vdwg.mxu0
    %475 = vst [vmem:[#allocation10] sm:$0xff] %v472
    // Predicated region
    $region54: #{tpu_custom_call.1} parent=1 // pred_check
      _
    $region55: #{tpu_custom_call.1} parent=1 // pred_check_branch
      %477 = sbr.rel (0) target = $region57
    $region56: #{tpu_custom_call.1} parent=1 // pred_region
      %s479 = ssub.s32 128, 128
      %480 = vsyncadd [#allocation4], %s479
      %s482 = sshll.u32 [#allocation10], 4
      %s483 = int_to_ptr.vmem [resolvable:$true] %s482
      %485 = dma.vmem_to_hbm [thread:$0]  %s483, 128, %s9, [#allocation4]
    $region57: #{tpu_custom_call.1} parent=1 // pred_fallthru
      _
    // Predicated region
    $region58: #{tpu_custom_call.1} parent=1 // pred_check
      _
    $region59: #{tpu_custom_call.1} parent=1 // pred_check_branch
      %487 = sbr.rel (0) target = $region61
    $region60: #{tpu_custom_call.1} parent=1 // pred_region
      %488 = dma.done [#allocation4], 128
    $region61: #{tpu_custom_call.1} parent=1 // pred_fallthru
      _
    %489 = vsyncpa [#allocation3], 1
    %490 = vsyncpa [#allocation6], 1
    %491 = vsyncpa [#allocation9], 1
    %492 = vsyncpa [#allocation4], 1

</llo_original>
